<compile_context>
chip_gen: v7x
topology: tpu7x:2x2x1
jax: 0.10.0
libtpu: 0.0.40
codegen_flags: <defaults>
</compile_context>

<pallas_src>
import functools

import jax
import jax.numpy as jnp
import numpy as np
from jax import lax
from jax.experimental import pallas as pl
from jax.experimental.pallas import tpu as pltpu


def _separable_taps(kernel, normalize, flip):
    """1-D taps (kh, kv) whose outer product equals the torch 2-D blur kernel."""
    k = np.asarray(kernel, dtype=np.float64)
    s = float(np.sum(k))
    if flip:
        k = k[::-1]
    kh = [float(v) for v in k]
    kv = [float(v) for v in (k / (s * s) if normalize else k)]
    return kh, kv


def _out_dim(n, stride):
    # conv output size for odd K with symmetric padding (== ceil(n / stride))
    return (n - 1) // stride + 1


def _blur_flat_kernel(x_ref, o_ref, *, H, W, kh, kv):
    """Blur on flattened planes. x_ref/o_ref: (CBLK, H*W); stride == 1."""
    HW = H * W
    pad_h = (len(kh) - 1) // 2
    pad_v = (len(kv) - 1) // 2

    xf = x_ref[...].astype(jnp.float32)
    # Edge masks hoisted: the iotas are built once per tile, not per tap.
    pos = lax.broadcasted_iota(jnp.int32, (1, HW), 1)
    col = pos % W

    # Horizontal pass: neighbours along W live at flat offset +-1.
    h = None
    for d, wt in enumerate(kh):
        off = d - pad_h
        if off == 0:
            term = xf if wt == 1.0 else xf * wt
        else:
            r = pltpu.roll(xf, shift=(-off) % HW, axis=1)     # r[p] = x[p + off]
            if wt != 1.0:
                r = r * wt
            m = (col >= -off) if off < 0 else (col < W - off)
            term = jnp.where(m, r, 0.0)
        h = term if h is None else h + term

    # Vertical pass: neighbours along H live at flat offset +-W.
    acc = None
    for d, wt in enumerate(kv):
        off = d - pad_v
        if off == 0:
            term = h if wt == 1.0 else h * wt
        else:
            r = pltpu.roll(h, shift=(-off * W) % HW, axis=1)  # r[p] = h[p + off*W]
            if wt != 1.0:
                r = r * wt
            m = (pos >= (-off) * W) if off < 0 else (pos < (H - off) * W)
            term = jnp.where(m, r, 0.0)
        acc = term if acc is None else acc + term

    o_ref[...] = acc.astype(o_ref.dtype)


def _blur_plane_kernel(x_ref, o_ref, *, H, W, stride, kh, kv):
    """Blur on (CBLK, H, W) planes; optional in-kernel stride decimation."""
    pad_h = (len(kh) - 1) // 2
    pad_v = (len(kv) - 1) // 2

    xf = x_ref[...].astype(jnp.float32)
    colw = lax.broadcasted_iota(jnp.int32, (1, 1, W), 2)   # hoisted masks
    rowh = lax.broadcasted_iota(jnp.int32, (1, H, 1), 1)

    h = None
    for d, wt in enumerate(kh):
        off = d - pad_h
        if off == 0:
            term = xf if wt == 1.0 else xf * wt
        else:
            r = pltpu.roll(xf, shift=(-off) % W, axis=2)
            if wt != 1.0:
                r = r * wt
            m = (colw >= -off) if off < 0 else (colw < W - off)
            term = jnp.where(m, r, 0.0)
        h = term if h is None else h + term

    acc = None
    for d, wt in enumerate(kv):
        off = d - pad_v
        if off == 0:
            term = h if wt == 1.0 else h * wt
        else:
            r = pltpu.roll(h, shift=(-off) % H, axis=1)
            if wt != 1.0:
                r = r * wt
            m = (rowh >= -off) if off < 0 else (rowh < H - off)
            term = jnp.where(m, r, 0.0)
        acc = term if acc is None else acc + term

    if stride > 1:
        # Fold stride decimation into the store: pick every stride-th row /
        # column with tiny batched selection matmuls (MXU is idle here), so
        # only the decimated output is ever written back to HBM.
        cb = acc.shape[0]
        Ho = _out_dim(H, stride)
        Wo = _out_dim(W, stride)
        rsel = (lax.broadcasted_iota(jnp.int32, (Ho, H), 1)
                == stride * lax.broadcasted_iota(jnp.int32, (Ho, H), 0)
                ).astype(jnp.float32)
        csel = (lax.broadcasted_iota(jnp.int32, (W, Wo), 0)
                == stride * lax.broadcasted_iota(jnp.int32, (W, Wo), 1)
                ).astype(jnp.float32)
        rsel = jnp.broadcast_to(rsel[None], (cb, Ho, H))
        csel = jnp.broadcast_to(csel[None], (cb, W, Wo))
        acc = jnp.einsum('brh,bhw->brw', rsel, acc,
                         preferred_element_type=jnp.float32)
        acc = jnp.einsum('brw,bwc->brc', acc, csel,
                         preferred_element_type=jnp.float32)

    o_ref[...] = acc.astype(o_ref.dtype)


def blur_layer(x, kernel=(1.0, 2.0, 1.0), normalize=True, flip=False, stride=1):
    """Pallas implementation of BlurLayer.forward. x: (N, C, H, W)."""
    N, C, H, W = x.shape
    K = len(kernel)
    assert K % 2 == 1, "Pallas BlurLayer supports odd blur kernel sizes"
    kh, kv = _separable_taps(kernel, normalize, flip)

    NC = N * C
    HW = H * W
    Ho = _out_dim(H, stride)
    Wo = _out_dim(W, stride)

    # Lane-dense flat layout whenever W would waste lanes; the reshape only
    # collapses contiguous axes so it is free.  stride>1 keeps the plane layout
    # so the decimated (Ho, Wo) block can be stored directly.
    use_flat = (stride == 1) and (W < 128)

    # --- generation-aware tiling -------------------------------------------
    try:
        vmem_cap = int(getattr(pltpu.get_tpu_info(), "vmem_capacity_bytes",
                               64 << 20))
    except Exception:
        vmem_cap = 64 << 20
    budget = vmem_cap // 2                       # headroom for double buffers
    itemsize = x.dtype.itemsize
    # 2x double-buffered input, 2x double-buffered output, ~5 live f32 temps.
    per_chan = 2 * HW * itemsize + 2 * Ho * Wo * itemsize + 5 * HW * 4
    cblk = max(1, budget // per_chan)

    gran = 8 if use_flat else 1                  # sublane granularity of blocks
    if NC >= 4 * gran:
        # >= 4 grid steps (>= 2 per TensorCore on v7x) so prefetch/writeback
        # overlaps compute instead of running serially.
        cblk = min(cblk, pl.cdiv(NC, 4))
    if use_flat:
        # (cblk, H*W) puts channels on sublanes: cblk must be a multiple of 8
        # or cover the whole channel axis.
        if cblk >= NC:
            cblk = NC
        else:
            cblk = max(gran, (cblk // gran) * gran)
            cblk = NC if cblk >= NC else cblk
    else:
        cblk = max(1, min(cblk, NC))
    grid = (pl.cdiv(NC, cblk),)

    vmem_limit = min(vmem_cap * 9 // 10,
                     max(32 << 20, per_chan * cblk + (8 << 20)))
    cparams = pltpu.CompilerParams(
        dimension_semantics=("parallel",),       # shard channel blocks over TCs
        vmem_limit_bytes=int(vmem_limit),
    )

    # TODO(synk): add an H-strip grid axis (with a pad-row halo) so planes
    # larger than a few MiB fit per-block VMEM budgets, especially on v7x.

    if use_flat:
        kern = functools.partial(_blur_flat_kernel, H=H, W=W, kh=kh, kv=kv)
        out = pl.pallas_call(
            kern,
            out_shape=jax.ShapeDtypeStruct((NC, HW), x.dtype),
            grid=grid,
            in_specs=[pl.BlockSpec((cblk, HW), lambda i: (i, 0))],
            out_specs=pl.BlockSpec((cblk, HW), lambda i: (i, 0)),
            compiler_params=cparams,
        )(x.reshape(NC, HW))
        return out.reshape(N, C, H, W)

    kern = functools.partial(_blur_plane_kernel, H=H, W=W, stride=stride,
                             kh=kh, kv=kv)
    out = pl.pallas_call(
        kern,
        out_shape=jax.ShapeDtypeStruct((NC, Ho, Wo), x.dtype),
        grid=grid,
        in_specs=[pl.BlockSpec((cblk, H, W), lambda i: (i, 0, 0))],
        out_specs=pl.BlockSpec((cblk, Ho, Wo), lambda i: (i, 0, 0)),
        compiler_params=cparams,
    )(x.reshape(NC, H, W))
    return out.reshape(N, C, Ho, Wo)


def _reference_blur(x, kernel=(1.0, 2.0, 1.0), normalize=True, flip=False, stride=1):
    """Pure-JAX reference matching F.conv2d(..., groups=C)."""
    N, C, H, W = x.shape
    k = jnp.asarray(kernel, jnp.float32)
    k2 = k[:, None] * k[None, :]
    if normalize:
        k2 = k2 / jnp.sum(k2)
    if flip:
        k2 = k2[::-1, ::-1]
    kh, kw = k2.shape
    pad = (kh - 1) // 2
    w = jnp.broadcast_to(k2[None, None], (C, 1, kh, kw)).astype(x.dtype)
    return lax.conv_general_dilated(
        x, w,
        window_strides=(stride, stride),
        padding=((pad, pad), (pad, pad)),
        dimension_numbers=("NCHW", "OIHW", "NCHW"),
        feature_group_count=C,
    )


if __name__ == "__main__":
    key = jax.random.PRNGKey(0)
    k1, k2, k3 = jax.random.split(key, 3)

    x1 = jax.random.normal(k1, (2, 4, 16, 16), dtype=jnp.float32)
    x2 = jax.random.normal(k2, (1, 40, 16, 16), dtype=jnp.float32)
    x3 = jax.random.normal(k3, (1, 4, 8, 128), dtype=jnp.float32)

    checks = [
        (x1, dict()),                                     # flat lane-dense path
        (x1, dict(stride=2)),                             # stride folded in-kernel
        (x1, dict(kernel=(1.0, 3.0, 2.0), flip=True)),    # asymmetric + flip
        (x2, dict()),                                     # multi-step grid (5 blocks)
        (x3, dict()),                                     # W >= 128 plane path
    ]

    for xin, kwargs in checks:
        y = jax.block_until_ready(blur_layer(xin, **kwargs))
        y_ref = _reference_blur(xin, **kwargs)
        assert y.shape == y_ref.shape, (y.shape, y_ref.shape, kwargs)
        assert jnp.allclose(y, y_ref, atol=1e-5, rtol=1e-5), kwargs

    print("KERNEL_OK")
</pallas_src>

<mosaic_0001>
module attributes {stable_mosaic.version = 11 : i64} {
  func.func @_blur_flat_kernel(%arg0: i32, %arg1: memref<8x256xf32, #tpu.memory_space<vmem>>, %arg2: memref<8x256xf32, #tpu.memory_space<vmem>>) attributes {dimension_semantics = [#tpu.dimension_semantics<parallel>], iteration_bounds = array<i64: 1>, scalar_prefetch = 0 : i64, scratch_operands = 0 : i64, tpu.core_type = #tpu.core_type<tc>, window_params = [{transform_indices = @transform_0, window_bounds = array<i64: 8, 256>}, {transform_indices = @transform_1, window_bounds = array<i64: 8, 256>}]} {
    %c0 = arith.constant 0 : index
    %c0_0 = arith.constant 0 : index
    %0 = vector.load %arg1[%c0, %c0_0] : memref<8x256xf32, #tpu.memory_space<vmem>>, vector<8x256xf32>
    %1 = tpu.iota {dimensions = array<i32: 1>} : vector<1x256xi32>
    %c16_i32 = arith.constant 16 : i32
    %c0_i32 = arith.constant 0 : i32
    %2 = arith.cmpi eq, %c16_i32, %c0_i32 : i32
    %c1_i32 = arith.constant 1 : i32
    %3 = arith.select %2, %c1_i32, %c16_i32 : i32
    %4 = vector.broadcast %3 : i32 to vector<1x256xi32>
    %5 = arith.remsi %1, %4 : vector<1x256xi32>
    %c0_i32_1 = arith.constant 0 : i32
    %6 = vector.broadcast %c0_i32_1 : i32 to vector<1x256xi32>
    %7 = arith.cmpi ne, %5, %6 : vector<1x256xi32>
    %c0_i32_2 = arith.constant 0 : i32
    %8 = vector.broadcast %c0_i32_2 : i32 to vector<1x256xi32>
    %9 = arith.cmpi slt, %5, %8 : vector<1x256xi32>
    %c0_i32_3 = arith.constant 0 : i32
    %10 = arith.cmpi slt, %3, %c0_i32_3 : i32
    %11 = vector.broadcast %10 : i1 to vector<1x256xi1>
    %12 = vector.broadcast %11 : vector<1x256xi1> to vector<1x256xi1>
    %13 = arith.xori %9, %12 : vector<1x256xi1>
    %14 = arith.andi %13, %7 : vector<1x256xi1>
    %15 = vector.broadcast %3 : i32 to vector<1x256xi32>
    %16 = arith.addi %5, %15 : vector<1x256xi32>
    %17 = arith.select %14, %16, %5 : vector<1x256xi1>, vector<1x256xi32>
    %c1_i32_4 = arith.constant 1 : i32
    %18 = tpu.dynamic_rotate %0 by %c1_i32_4 dim 1 : vector<8x256xf32>, i32 -> vector<8x256xf32>
    %c1_i32_5 = arith.constant 1 : i32
    %19 = vector.broadcast %c1_i32_5 : i32 to vector<1x256xi32>
    %20 = arith.cmpi sge, %17, %19 : vector<1x256xi32>
    %cst = arith.constant 0.000000e+00 : f32
    %21 = vector.shape_cast %20 : vector<1x256xi1> to vector<1x256xi1>
    %22 = vector.broadcast %21 : vector<1x256xi1> to vector<8x256xi1>
    %23 = vector.broadcast %cst : f32 to vector<8x256xf32>
    %24 = arith.select %22, %18, %23 : vector<8x256xi1>, vector<8x256xf32>
    %cst_6 = arith.constant 2.000000e+00 : f32
    %25 = vector.broadcast %cst_6 : f32 to vector<8x256xf32>
    %26 = arith.mulf %0, %25 : vector<8x256xf32>
    %27 = arith.addf %24, %26 : vector<8x256xf32>
    %c255_i32 = arith.constant 255 : i32
    %28 = tpu.dynamic_rotate %0 by %c255_i32 dim 1 : vector<8x256xf32>, i32 -> vector<8x256xf32>
    %c15_i32 = arith.constant 15 : i32
    %29 = vector.broadcast %c15_i32 : i32 to vector<1x256xi32>
    %30 = arith.cmpi slt, %17, %29 : vector<1x256xi32>
    %cst_7 = arith.constant 0.000000e+00 : f32
    %31 = vector.shape_cast %30 : vector<1x256xi1> to vector<1x256xi1>
    %32 = vector.broadcast %31 : vector<1x256xi1> to vector<8x256xi1>
    %33 = vector.broadcast %cst_7 : f32 to vector<8x256xf32>
    %34 = arith.select %32, %28, %33 : vector<8x256xi1>, vector<8x256xf32>
    %35 = arith.addf %27, %34 : vector<8x256xf32>
    %c16_i32_8 = arith.constant 16 : i32
    %36 = tpu.dynamic_rotate %35 by %c16_i32_8 dim 1 : vector<8x256xf32>, i32 -> vector<8x256xf32>
    %cst_9 = arith.constant 6.250000e-02 : f32
    %37 = vector.broadcast %cst_9 : f32 to vector<8x256xf32>
    %38 = arith.mulf %36, %37 : vector<8x256xf32>
    %c16_i32_10 = arith.constant 16 : i32
    %39 = vector.broadcast %c16_i32_10 : i32 to vector<1x256xi32>
    %40 = arith.cmpi sge, %1, %39 : vector<1x256xi32>
    %cst_11 = arith.constant 0.000000e+00 : f32
    %41 = vector.shape_cast %40 : vector<1x256xi1> to vector<1x256xi1>
    %42 = vector.broadcast %41 : vector<1x256xi1> to vector<8x256xi1>
    %43 = vector.broadcast %cst_11 : f32 to vector<8x256xf32>
    %44 = arith.select %42, %38, %43 : vector<8x256xi1>, vector<8x256xf32>
    %cst_12 = arith.constant 1.250000e-01 : f32
    %45 = vector.broadcast %cst_12 : f32 to vector<8x256xf32>
    %46 = arith.mulf %35, %45 : vector<8x256xf32>
    %47 = arith.addf %44, %46 : vector<8x256xf32>
    %c240_i32 = arith.constant 240 : i32
    %48 = tpu.dynamic_rotate %35 by %c240_i32 dim 1 : vector<8x256xf32>, i32 -> vector<8x256xf32>
    %cst_13 = arith.constant 6.250000e-02 : f32
    %49 = vector.broadcast %cst_13 : f32 to vector<8x256xf32>
    %50 = arith.mulf %48, %49 : vector<8x256xf32>
    %c240_i32_14 = arith.constant 240 : i32
    %51 = vector.broadcast %c240_i32_14 : i32 to vector<1x256xi32>
    %52 = arith.cmpi slt, %1, %51 : vector<1x256xi32>
    %cst_15 = arith.constant 0.000000e+00 : f32
    %53 = vector.shape_cast %52 : vector<1x256xi1> to vector<1x256xi1>
    %54 = vector.broadcast %53 : vector<1x256xi1> to vector<8x256xi1>
    %55 = vector.broadcast %cst_15 : f32 to vector<8x256xf32>
    %56 = arith.select %54, %50, %55 : vector<8x256xi1>, vector<8x256xf32>
    %57 = arith.addf %47, %56 : vector<8x256xf32>
    %c0_16 = arith.constant 0 : index
    %c0_17 = arith.constant 0 : index
    %58 = vector.load %arg2[%c0_16, %c0_17] : memref<8x256xf32, #tpu.memory_space<vmem>>, vector<8x256xf32>
    tpu.vector_store %arg2[%c0_16, %c0_17], %57 {strides = array<i32>} : memref<8x256xf32, #tpu.memory_space<vmem>>, vector<8x256xf32>,
    return
  }
  func.func @transform_0(%arg0: i32) -> (i32, i32) {
    %c0_i32 = arith.constant 0 : i32
    %c0_i32_0 = arith.constant 0 : i32
    return %arg0, %c0_i32 : i32, i32
  }
  func.func @transform_1(%arg0: i32) -> (i32, i32) {
    %c0_i32 = arith.constant 0 : i32
    %c0_i32_0 = arith.constant 0 : i32
    return %arg0, %c0_i32 : i32, i32
  }
}

</mosaic_0001>

<llo_original>
// kernel: tpu_custom_call.1
$region0: #{tpu_custom_call.1}
  #allocation0 [shape = 'u32[]', space=smem, size = 0x4, offset = 0x4, fixed_abs, tag = 'smem constant byte address 0x4 - core index']
  #allocation1 [shape = 'u32[144,128]{1,0:T(1,128)}', space=vmem, size = 0x12000, scoped, tag = 'internal scratch']
  %s0 = inlined_call_operand.hbm [shape: f32[8,256], index: 0, kind: input, shape index: {}]
  %s1 = inlined_call_operand.hbm [shape: f32[8,256], index: 1, kind: output, shape index: {}]
  %s2 = sld [smem:[#allocation0]]
  $region18: #{tpu_custom_call.1} parent=0
    _
  %s4 = ssub.s32 1, %s2
  %s5 = scalar_select 0, %s4, %s2
  $region1: #{tpu_custom_call.1} parent=0
    #allocation2 [shape = 'u8[8192]{0}', space=vmem, size = 0x2000, scoped, tag = 'input window, operand 0, single buffered']
    #allocation3 [shape = 's32[1]{0}', space=sflag, size = 0x4, scoped, tag = 'scoped memory for tpu_custom_call.1']
    #allocation4 [shape = 's32[1]{0}', space=sflag, size = 0x4, scoped, tag = 'scoped memory for tpu_custom_call.1']
    #allocation5 [shape = 'u8[8192]{0}', space=vmem, size = 0x2000, scoped, tag = 'output window, operand 0, single buffered']
    %6 = vsyncpa [#allocation3], 0
    %7 = vsyncpa [#allocation4], 0
    // Predicated region
    $region2: #{tpu_custom_call.1} parent=1 // pred_check
      _
    $region3: #{tpu_custom_call.1} parent=1 // pred_check_branch
      %9 = sbr.rel (0) target = $region5
    $region4: #{tpu_custom_call.1} parent=1 // pred_region
      %s11 = ssub.s32 256, 256
      %12 = vsyncadd [#allocation3], %s11
      %s14 = sshll.u32 [#allocation2], 4
      %s15 = int_to_ptr.vmem [resolvable:$true] %s14
      %17 = dma.hbm_to_vmem [thread:$0]  %s0, 256, %s15, [#allocation3]
    $region5: #{tpu_custom_call.1} parent=1 // pred_fallthru
      _
    // Predicated region
    $region6: #{tpu_custom_call.1} parent=1 // pred_check
      _
    $region7: #{tpu_custom_call.1} parent=1 // pred_check_branch
      %19 = sbr.rel (0) target = $region9
    $region8: #{tpu_custom_call.1} parent=1 // pred_region
      %20 = dma.done [#allocation3], 256
    $region9: #{tpu_custom_call.1} parent=1 // pred_fallthru
      _
    %v21 = vld [vmem:[#allocation2] sm:$0xff]
    %v22 = vld [vmem:[#allocation2 + $0x8] sm:$0xff]
    %v23 = vlaneseq
    %v24 = vand.u32 %v23, 127
    %v25 = vadd.s32 %v24, 128
    %vm26 = vcmp.lt.s32.totalorder %v24, 0
    %v27 = vsub.s32 0, %v24
    %v28 = vsel %vm26, %v27, %v24
    %v29 = vshrl.u32 %v28, 4
    %v30 = vand.u32 %v28, 15
    %v31 = vsub.s32 0, %v30
    %v32 = vsel %vm26, %v31, %v30
    %vm33 = vcmp.lt.s32.totalorder %v25, 0
    %v34 = vsub.s32 0, %v25
    %v35 = vsel %vm33, %v34, %v25
    %v36 = vshrl.u32 %v35, 4
    %v37 = vand.u32 %v35, 15
    %v38 = vsub.s32 0, %v37
    %v39 = vsel %vm33, %v38, %v37
    %vm40 = vcmp.ne.s32.totalorder %v32, 0
    %vm41 = vcmp.ne.s32.totalorder %v39, 0
    %vm42 = vcmp.lt.s32.totalorder %v32, 0
    %vm43 = vcmp.lt.s32.totalorder %v39, 0
    %vm44 = vmand %vm42, %vm40
    %vm45 = vmand %vm43, %vm41
    %v46 = vadd.s32 %v32, 16
    %v47 = vadd.s32 %v39, 16
    %v48 = vsel %vm44, %v46, %v32
    %v49 = vsel %vm45, %v47, %v39
    %50 = vrot.lane.b32.xlu0 %v21, 1
    %v51 = vpop.permute.xlu0 %50
    %52 = vrot.lane.b32.xlu0 %v22, 1
    %v53 = vpop.permute.xlu0 %52
    %vm54 = vcmp.lt.s32.totalorder %v24, 1
    %v55 = vsel %vm54, %v51, %v53
    %v56 = vsel %vm54, %v53, %v51
    %vm57 = vcmp.ge.s32.totalorder %v48, 1
    %vm58 = vcmp.ge.s32.totalorder %v49, 1
    %v59 = vsel %vm57, 1, 0
    %v60 = vsel %vm58, 1, 0
    %vm61 = vcmp.eq.s32.totalorder %v59, 1
    %vm62 = vcmp.eq.s32.totalorder %v60, 1
    %v63 = vsel %vm61, %v56, 0.0
    %v64 = vsel %vm62, %v55, 0.0
    %v65 = vmul.f32 %v21, 2.0
    %v66 = vmul.f32 %v22, 2.0
    %v67 = vadd.f32 %v63, %v65
    %v68 = vadd.f32 %v64, %v66
    %69 = vrot.lane.b32.xlu0 %v21, 127
    %v70 = vpop.permute.xlu0 %69
    %71 = vrot.lane.b32.xlu0 %v22, 127
    %v72 = vpop.permute.xlu0 %71
    %vm73 = vcmp.lt.s32.totalorder %v24, 127
    %v74 = vsel %vm73, %v70, %v72
    %v75 = vsel %vm73, %v72, %v70
    %vm76 = vcmp.lt.s32.totalorder %v48, 15
    %vm77 = vcmp.lt.s32.totalorder %v49, 15
    %v78 = vsel %vm76, 1, 0
    %v79 = vsel %vm77, 1, 0
    %vm80 = vcmp.eq.s32.totalorder %v78, 1
    %vm81 = vcmp.eq.s32.totalorder %v79, 1
    %v82 = vsel %vm80, %v74, 0.0
    %v83 = vsel %vm81, %v75, 0.0
    %v84 = vadd.f32 %v67, %v82
    %v85 = vadd.f32 %v68, %v83
    %86 = vrot.lane.b32.xlu0 %v84, 16
    %v87 = vpop.permute.xlu0 %86
    %88 = vrot.lane.b32.xlu0 %v85, 16
    %v89 = vpop.permute.xlu0 %88
    %vm90 = vcmp.lt.s32.totalorder %v24, 16
    %v91 = vsel %vm90, %v87, %v89
    %v92 = vsel %vm90, %v89, %v87
    %v93 = vmul.f32 %v92, 0.0625
    %v94 = vmul.f32 %v91, 0.0625
    %vm95 = vcmp.ge.s32.totalorder %v24, 16
    %vm96 = vcmp.ge.s32.totalorder %v25, 16
    %v97 = vsel %vm95, 1, 0
    %v98 = vsel %vm96, 1, 0
    %vm99 = vcmp.eq.s32.totalorder %v97, 1
    %vm100 = vcmp.eq.s32.totalorder %v98, 1
    %v101 = vsel %vm99, %v93, 0.0
    %v102 = vsel %vm100, %v94, 0.0
    %v103 = vmul.f32 %v84, 0.125
    %v104 = vmul.f32 %v85, 0.125
    %v105 = vadd.f32 %v101, %v103
    %v106 = vadd.f32 %v102, %v104
    %107 = vrot.lane.b32.xlu0 %v84, 112
    %v108 = vpop.permute.xlu0 %107
    %109 = vrot.lane.b32.xlu0 %v85, 112
    %v110 = vpop.permute.xlu0 %109
    %vm111 = vcmp.lt.s32.totalorder %v24, 112
    %v112 = vsel %vm111, %v108, %v110
    %v113 = vsel %vm111, %v110, %v108
    %v114 = vmul.f32 %v112, 0.0625
    %v115 = vmul.f32 %v113, 0.0625
    %vm116 = vcmp.lt.s32.totalorder %v24, 240
    %vm117 = vcmp.lt.s32.totalorder %v25, 240
    %v118 = vsel %vm116, 1, 0
    %v119 = vsel %vm117, 1, 0
    %vm120 = vcmp.eq.s32.totalorder %v118, 1
    %vm121 = vcmp.eq.s32.totalorder %v119, 1
    %v122 = vsel %vm120, %v114, 0.0
    %v123 = vsel %vm121, %v115, 0.0
    %v124 = vadd.f32 %v105, %v122
    %v125 = vadd.f32 %v106, %v123
    %126 = vst [vmem:[#allocation5] sm:$0xff] %v124
    %127 = vst [vmem:[#allocation5 + $0x8] sm:$0xff] %v125
    // Predicated region
    $region10: #{tpu_custom_call.1} parent=1 // pred_check
      _
    $region11: #{tpu_custom_call.1} parent=1 // pred_check_branch
      %129 = sbr.rel (0) target = $region13
    $region12: #{tpu_custom_call.1} parent=1 // pred_region
      %s131 = ssub.s32 256, 256
      %132 = vsyncadd [#allocation4], %s131
      %s134 = sshll.u32 [#allocation5], 4
      %s135 = int_to_ptr.vmem [resolvable:$true] %s134
      %137 = dma.vmem_to_hbm [thread:$0]  %s135, 256, %s1, [#allocation4]
    $region13: #{tpu_custom_call.1} parent=1 // pred_fallthru
      _
    // Predicated region
    $region14: #{tpu_custom_call.1} parent=1 // pred_check
      _
    $region15: #{tpu_custom_call.1} parent=1 // pred_check_branch
      %139 = sbr.rel (0) target = $region17
    $region16: #{tpu_custom_call.1} parent=1 // pred_region
      %140 = dma.done [#allocation4], 256
    $region17: #{tpu_custom_call.1} parent=1 // pred_fallthru
      _
    %141 = vsyncpa [#allocation3], 1
    %142 = vsyncpa [#allocation4], 1

</llo_original>
